<compile_context>
chip_gen: v5e
topology: v5e:2x2
jax: 0.10.0
libtpu: 0.0.40
codegen_flags: <defaults>
</compile_context>

<pallas_src>
import jax
import jax.numpy as jnp
from jax.experimental import pallas as pl
from jax.experimental.pallas import tpu as pltpu


def _round_up(v, m):
    return -(-v // m) * m


def _parallel_gene_kernel(x_ref, w_ref, b_ref, o_ref):
    # x_ref: (T, Bt, Gt)   w_ref: (T, Gt)   b_ref: (1, Gt)   o_ref: (Bt, Gt)
    n_tech = x_ref.shape[0]
    # Unrolled running accumulation in f32 (low vreg pressure even at large tiles).
    acc = x_ref[0].astype(jnp.float32) * w_ref[pl.ds(0, 1), :].astype(jnp.float32)
    for t in range(1, n_tech):
        acc = acc + x_ref[t].astype(jnp.float32) * w_ref[pl.ds(t, 1), :].astype(jnp.float32)
    acc = acc + b_ref[...].astype(jnp.float32)            # broadcast (1, Gt) -> (Bt, Gt)
    o_ref[...] = jnp.maximum(acc, 0.0).astype(o_ref.dtype)


def parallel_gene_layers(x, weights, bias, *, batch_tile=None, gene_tile=None,
                         vmem_block_budget_bytes=None):
    """x: (n_tech, batch, n_genes); weights: (n_genes, n_tech); bias: (n_genes,).

    Returns (batch, n_genes) = relu(einsum('tbg,gt->bg', x, weights) + bias).
    """
    n_tech, batch, n_genes = x.shape
    assert weights.shape == (n_genes, n_tech)
    assert bias.shape == (n_genes,)

    x_isize = jnp.dtype(x.dtype).itemsize
    w_isize = jnp.dtype(weights.dtype).itemsize
    b_isize = jnp.dtype(bias.dtype).itemsize
    out_dtype = x.dtype
    o_isize = jnp.dtype(out_dtype).itemsize

    # Dtype-aware sublane granule: (8,128) f32 / (16,128) bf16 / (32,128) int8-fp8.
    granule = max(8, 32 // x_isize)

    def two_buf_bytes(bt, gt):
        x_blk = n_tech * bt * gt * x_isize
        o_blk = bt * gt * o_isize
        w_blk = n_tech * gt * w_isize
        b_blk = gt * b_isize
        return 2 * (x_blk + o_blk + w_blk + b_blk)        # double-buffered pipeline

    # ---- VMEM budget / limit: capacity-derived; never clamp below the footprint ----
    try:
        vmem_cap = int(pltpu.get_tpu_info().vmem_capacity_bytes)
    except Exception:
        vmem_cap = 64 << 20                                # conservative: v7x per-TC capacity
    if vmem_block_budget_bytes is None:
        # ~48 MiB blocks on v7x (64 MiB/TC), ~64 MiB on v5e/v6e (128 MiB VMEM).
        vmem_block_budget_bytes = min(vmem_cap - (16 << 20), 64 << 20)
    budget = max(8 << 20, min(int(vmem_block_budget_bytes), vmem_cap - (8 << 20)))

    genes_rounded = _round_up(n_genes, 128)
    batch_rounded = _round_up(batch, granule)

    # ---- tile selection: full (lane-dense) gene axis preferred, shrink batch first ----
    if gene_tile is None:
        gene_tile = genes_rounded
    else:
        gene_tile = min(_round_up(gene_tile, 128), genes_rounded)
    if batch_tile is None:
        batch_tile = min(batch_rounded, 1024)
    else:
        batch_tile = min(_round_up(batch_tile, granule), batch_rounded)

    while two_buf_bytes(batch_tile, gene_tile) > budget and batch_tile > granule:
        batch_tile = max(granule, (batch_tile // 2) // granule * granule)

    # Huge-gene fallback: keep gene_tile giving >=2 KiB-class contiguous runs and regrow
    # batch_tile to fill the budget (fewer, longer DMA descriptors), instead of pinning
    # batch_tile at the granule with a collapsed gene tile.
    if two_buf_bytes(batch_tile, gene_tile) > budget:
        gene_tile = min(gene_tile, 2048)
        while two_buf_bytes(granule, gene_tile) > budget and gene_tile > 128:
            gene_tile = max(128, (gene_tile // 2) // 128 * 128)
        batch_tile = granule
        while (batch_tile + granule <= min(batch_rounded, 1024)
               and two_buf_bytes(batch_tile + granule, gene_tile) <= budget):
            batch_tile += granule

    # Guarantee >=2 grid steps along a 'parallel' axis so both v7x TensorCores get work
    # (negligible cost on single-TC v5e/v6e: one extra ~0.35 us grid step).
    if pl.cdiv(n_genes, gene_tile) * pl.cdiv(batch, batch_tile) < 2:
        if batch_tile >= 2 * granule:
            batch_tile = _round_up(batch_tile // 2, granule)
        elif gene_tile >= 256 and n_genes > 128:
            gene_tile = max(128, _round_up(gene_tile // 2, 128))

    grid = (pl.cdiv(n_genes, gene_tile), pl.cdiv(batch, batch_tile))   # gene outer, batch inner

    # Pad only the tiny weight/bias slabs to a gene-tile multiple; x and the output use
    # partial last blocks (cdiv grid) — no HBM round-trip pad/slice copies of the big tensors.
    genes_p = grid[0] * gene_tile
    w_t = weights.T                                        # (n_tech, n_genes): genes on lane axis
    b2d = bias.reshape(1, n_genes)
    if genes_p != n_genes:
        w_t = jnp.pad(w_t, ((0, 0), (0, genes_p - n_genes)))
        b2d = jnp.pad(b2d, ((0, 0), (0, genes_p - n_genes)))

    vmem_limit = min(two_buf_bytes(batch_tile, gene_tile) + (8 << 20), vmem_cap)

    cost = pl.CostEstimate(
        flops=2 * n_tech * batch * n_genes,
        transcendentals=0,
        bytes_accessed=(n_tech + 1) * batch * n_genes * x_isize
        + n_genes * n_tech * w_isize + n_genes * b_isize,
    )

    return pl.pallas_call(
        _parallel_gene_kernel,
        out_shape=jax.ShapeDtypeStruct((batch, n_genes), out_dtype),
        grid=grid,
        in_specs=[
            pl.BlockSpec((n_tech, batch_tile, gene_tile), lambda g, b: (0, b, g)),
            pl.BlockSpec((n_tech, gene_tile), lambda g, b: (0, g)),   # resident across batch
            pl.BlockSpec((1, gene_tile), lambda g, b: (0, g)),        # resident across batch
        ],
        out_specs=pl.BlockSpec((batch_tile, gene_tile), lambda g, b: (b, g)),
        compiler_params=pltpu.CompilerParams(
            dimension_semantics=("parallel", "parallel"),   # shards grid across v7x's 2 TCs
            vmem_limit_bytes=int(vmem_limit),
        ),
        cost_estimate=cost,
    )(x, w_t, b2d)


def reference(x, weights, bias):
    return jax.nn.relu(jnp.einsum("tbg,gt->bg", x, weights) + bias[None, :])


def _check(n_tech, batch, n_genes, seed):
    key = jax.random.PRNGKey(seed)
    k_x, k_w, k_b = jax.random.split(key, 3)
    x = jax.random.normal(k_x, (n_tech, batch, n_genes), dtype=jnp.float32)
    weights = jax.random.normal(k_w, (n_genes, n_tech), dtype=jnp.float32)
    bias = jax.random.normal(k_b, (n_genes,), dtype=jnp.float32)

    out = jax.block_until_ready(parallel_gene_layers(x, weights, bias))
    ref = reference(x, weights, bias)
    assert out.shape == (batch, n_genes)
    assert jnp.allclose(out, ref, atol=1e-5, rtol=1e-5), \
        f"mismatch vs reference for shape (T={n_tech}, B={batch}, G={n_genes})"


if __name__ == "__main__":
    # Aligned shapes (full blocks everywhere).
    _check(n_tech=4, batch=8, n_genes=256, seed=0)
    # Unaligned shapes (exercises the cdiv-grid partial-last-block path, no pad/slice of x/out).
    _check(n_tech=3, batch=6, n_genes=300, seed=0)
    print("KERNEL_OK")
</pallas_src>

<mosaic_0001>
module attributes {stable_mosaic.version = 11 : i64} {
  func.func @_parallel_gene_kernel(%arg0: i32, %arg1: i32, %arg2: memref<4x8x128xf32, #tpu.memory_space<vmem>>, %arg3: memref<4x128xf32, #tpu.memory_space<vmem>>, %arg4: memref<1x128xf32, #tpu.memory_space<vmem>>, %arg5: memref<8x128xf32, #tpu.memory_space<vmem>>) attributes {dimension_semantics = [#tpu.dimension_semantics<parallel>, #tpu.dimension_semantics<parallel>], iteration_bounds = array<i64: 2, 1>, scalar_prefetch = 0 : i64, scratch_operands = 0 : i64, tpu.core_type = #tpu.core_type<tc>, window_params = [{transform_indices = @transform_0, window_bounds = array<i64: 4, 8, 128>}, {transform_indices = @transform_1, window_bounds = array<i64: 4, 128>}, {transform_indices = @transform_2, window_bounds = array<i64: 1, 128>}, {transform_indices = @transform_3, window_bounds = array<i64: 8, 128>}]} {
    %c0 = arith.constant 0 : index
    %c0_0 = arith.constant 0 : index
    %c0_1 = arith.constant 0 : index
    %0 = vector.load %arg2[%c0, %c0_0, %c0_1] : memref<4x8x128xf32, #tpu.memory_space<vmem>>, vector<1x8x128xf32>
    %1 = vector.shape_cast %0 : vector<1x8x128xf32> to vector<8x128xf32>
    %c0_2 = arith.constant 0 : index
    %c0_3 = arith.constant 0 : index
    %2 = vector.load %arg3[%c0_2, %c0_3] : memref<4x128xf32, #tpu.memory_space<vmem>>, vector<1x128xf32>
    %3 = vector.broadcast %2 : vector<1x128xf32> to vector<8x128xf32>
    %4 = arith.mulf %1, %3 : vector<8x128xf32>
    %c1 = arith.constant 1 : index
    %c0_4 = arith.constant 0 : index
    %c0_5 = arith.constant 0 : index
    %5 = vector.load %arg2[%c1, %c0_4, %c0_5] : memref<4x8x128xf32, #tpu.memory_space<vmem>>, vector<1x8x128xf32>
    %6 = vector.shape_cast %5 : vector<1x8x128xf32> to vector<8x128xf32>
    %c1_6 = arith.constant 1 : index
    %c0_7 = arith.constant 0 : index
    %7 = vector.load %arg3[%c1_6, %c0_7] : memref<4x128xf32, #tpu.memory_space<vmem>>, vector<1x128xf32>
    %8 = vector.broadcast %7 : vector<1x128xf32> to vector<8x128xf32>
    %9 = arith.mulf %6, %8 : vector<8x128xf32>
    %10 = arith.addf %4, %9 : vector<8x128xf32>
    %c2 = arith.constant 2 : index
    %c0_8 = arith.constant 0 : index
    %c0_9 = arith.constant 0 : index
    %11 = vector.load %arg2[%c2, %c0_8, %c0_9] : memref<4x8x128xf32, #tpu.memory_space<vmem>>, vector<1x8x128xf32>
    %12 = vector.shape_cast %11 : vector<1x8x128xf32> to vector<8x128xf32>
    %c2_10 = arith.constant 2 : index
    %c0_11 = arith.constant 0 : index
    %13 = vector.load %arg3[%c2_10, %c0_11] : memref<4x128xf32, #tpu.memory_space<vmem>>, vector<1x128xf32>
    %14 = vector.broadcast %13 : vector<1x128xf32> to vector<8x128xf32>
    %15 = arith.mulf %12, %14 : vector<8x128xf32>
    %16 = arith.addf %10, %15 : vector<8x128xf32>
    %c3 = arith.constant 3 : index
    %c0_12 = arith.constant 0 : index
    %c0_13 = arith.constant 0 : index
    %17 = vector.load %arg2[%c3, %c0_12, %c0_13] : memref<4x8x128xf32, #tpu.memory_space<vmem>>, vector<1x8x128xf32>
    %18 = vector.shape_cast %17 : vector<1x8x128xf32> to vector<8x128xf32>
    %c3_14 = arith.constant 3 : index
    %c0_15 = arith.constant 0 : index
    %19 = vector.load %arg3[%c3_14, %c0_15] : memref<4x128xf32, #tpu.memory_space<vmem>>, vector<1x128xf32>
    %20 = vector.broadcast %19 : vector<1x128xf32> to vector<8x128xf32>
    %21 = arith.mulf %18, %20 : vector<8x128xf32>
    %22 = arith.addf %16, %21 : vector<8x128xf32>
    %c0_16 = arith.constant 0 : index
    %c0_17 = arith.constant 0 : index
    %23 = vector.load %arg4[%c0_16, %c0_17] : memref<1x128xf32, #tpu.memory_space<vmem>>, vector<1x128xf32>
    %24 = vector.broadcast %23 : vector<1x128xf32> to vector<8x128xf32>
    %25 = arith.addf %22, %24 : vector<8x128xf32>
    %cst = arith.constant 0.000000e+00 : f32
    %26 = vector.broadcast %cst : f32 to vector<8x128xf32>
    %27 = arith.maximumf %25, %26 : vector<8x128xf32>
    %c0_18 = arith.constant 0 : index
    %c0_19 = arith.constant 0 : index
    %28 = vector.load %arg5[%c0_18, %c0_19] : memref<8x128xf32, #tpu.memory_space<vmem>>, vector<8x128xf32>
    tpu.vector_store %arg5[%c0_18, %c0_19], %27 {strides = array<i32>} : memref<8x128xf32, #tpu.memory_space<vmem>>, vector<8x128xf32>,
    return
  }
  func.func @transform_0(%arg0: i32, %arg1: i32) -> (i32, i32, i32) {
    %c0_i32 = arith.constant 0 : i32
    %c0_i32_0 = arith.constant 0 : i32
    return %c0_i32, %arg1, %arg0 : i32, i32, i32
  }
  func.func @transform_1(%arg0: i32, %arg1: i32) -> (i32, i32) {
    %c0_i32 = arith.constant 0 : i32
    %c0_i32_0 = arith.constant 0 : i32
    return %c0_i32, %arg0 : i32, i32
  }
  func.func @transform_2(%arg0: i32, %arg1: i32) -> (i32, i32) {
    %c0_i32 = arith.constant 0 : i32
    %c0_i32_0 = arith.constant 0 : i32
    return %c0_i32, %arg0 : i32, i32
  }
  func.func @transform_3(%arg0: i32, %arg1: i32) -> (i32, i32) {
    %c0_i32 = arith.constant 0 : i32
    return %arg1, %arg0 : i32, i32
  }
}

</mosaic_0001>

<llo_original>
// kernel: tpu_custom_call.1
$region0: #{tpu_custom_call.1}
  #allocation0 [shape = 'u32[]', space=smem, size = 0x4, offset = 0x4, fixed_abs, tag = 'smem constant byte address 0x4 - core index']
  #allocation1 [shape = 'u32[72,128]{1,0:T(1,128)}', space=vmem, size = 0x9000, scoped, tag = 'internal scratch']
  %s0 = inlined_call_operand.hbm [shape: f32[4,8,256], index: 0, kind: input, shape index: {}]
  %s1 = inlined_call_operand.hbm [shape: f32[4,256], index: 1, kind: input, shape index: {}]
  %s2 = inlined_call_operand.hbm [shape: f32[1,256], index: 2, kind: input, shape index: {}]
  %s3 = inlined_call_operand.hbm [shape: f32[8,256], index: 3, kind: output, shape index: {}]
  %s4 = sld [smem:[#allocation0]]
  $region57: #{tpu_custom_call.1} parent=0
    _
  %s6 = ssub.s32 1, %s4
  %s7 = scalar_select 0, %s6, %s4
  $region1: #{tpu_custom_call.1} parent=0
    #allocation2 [shape = 'u8[32768]{0}', space=vmem, size = 0x8000, scoped, tag = 'input window, operand 0']
    #allocation3 [shape = 's32[2]{0}', space=sflag, size = 0x8, scoped, tag = 'scoped memory for tpu_custom_call.1']
    #allocation4 [shape = 's32[2]{0}', space=sflag, size = 0x8, scoped, tag = 'scoped memory for tpu_custom_call.1']
    #allocation5 [shape = 'u8[4096]{0}', space=vmem, size = 0x1000, scoped, tag = 'input window, operand 1']
    #allocation6 [shape = 's32[2]{0}', space=sflag, size = 0x8, scoped, tag = 'scoped memory for tpu_custom_call.1']
    #allocation7 [shape = 'u8[1024]{0}', space=vmem, size = 0x400, scoped, tag = 'input window, operand 2']
    #allocation8 [shape = 'u8[8192]{0}', space=vmem, size = 0x2000, scoped, tag = 'output window, operand 0']
    %8 = vsyncpa [#allocation3], 0
    %s9 = scalar_lea.sflag [#allocation3], 1
    %10 = vsyncpa %s9, 0
    %11 = vsyncpa [#allocation6], 0
    %s12 = scalar_lea.sflag [#allocation6], 1
    %13 = vsyncpa %s12, 0
    %14 = vsyncpa [#allocation4], 0
    %s15 = scalar_lea.sflag [#allocation4], 1
    %16 = vsyncpa %s15, 0
    loop: start=0, step=1, limit=4
    $region2: #{tpu_custom_call.1} parent=1 // loop_pre_header
      _
    $region3: #{tpu_custom_call.1} parent=1 // loop_header
      %s18 = sphi 0, %s22
      %p19 = scmp.ge.s32.totalorder %s18, 4
      %s25 = sphi 0, %s37
      %s26 = sphi 0, %s33
      %s27 = sphi 0, %s25
      %s28 = sphi 0, %s26
      %s29 = sphi 0, %s27
      %s30 = sphi 0, %s28
      %s42 = sphi 0, %s44
      %s45 = sphi 0, %s42
      %s46 = sphi 0, %s45
      %s62 = sphi 0, %s46
      %s68 = sphi 0, %s70
      %s71 = sphi 0, %s68
      %s72 = sphi 0, %s71
      %s88 = sphi 0, %s72
      %s94 = sphi 0, %s96
      %s97 = sphi 0, %s94
      %s98 = sphi 0, %s97
      %s114 = sphi 0, %s98
      %s122 = sphi 0, %s124
      %s125 = sphi 0, %s122
      %s126 = sphi 0, %s125
      %s142 = sphi 0, %s126
    $region4: #{tpu_custom_call.1} parent=1 // loop_header_branch
      %21 = sbr.rel (%p19) target = $region8
    $region5: #{tpu_custom_call.1} parent=1 // loop_body
      %s23 = ssub.s32 %s18, 1
      %s24 = ssub.s32 %s18, 2
      %s31 = sadd.s32 1, %s26
      %p32 = scmp.ge.s32.totalorder %s31, 1
      %s33 = scalar_select %p32, 0, %s31
      %s34 = sadd.s32 1, %s25
      %s35 = scalar_select %p32, %s34, %s25
      %p36 = scmp.ge.s32.totalorder %s35, 2
      %s37 = scalar_select %p36, 0, %s35
      %s38 = ssub.s32 %s26, %s33
      %s39 = ssub.s32 %s25, %s37
      %s40 = sor.u32 %s38, %s39
      %p41 = scmp.eq.s32.totalorder %s40, 0
      %s43 = sadd.s32 %s42, 1
      %s44 = scalar_select %p41, %s42, %s43
      %p47 = pneg %p41
      %p48 = scmp.eq.s32.totalorder %s18, 1
      %p49 = por %p47, %p48
      %p50 = scmp.ne.s32.totalorder %s42, %s45
      %p51 = scmp.eq.s32.totalorder %s18, 0
      %p52 = por %p50, %p51
      %p53 = scmp.ne.s32.totalorder %s42, %s45
      %p54 = scmp.eq.s32.totalorder %s23, 1
      %p55 = por %p53, %p54
      %p56 = scmp.ne.s32.totalorder %s45, %s46
      %p57 = scmp.eq.s32.totalorder %s23, 0
      %p58 = por %p56, %p57
      %p59 = scmp.ne.s32.totalorder %s45, %s46
      %p60 = scmp.eq.s32.totalorder %s24, 1
      %p61 = por %p59, %p60
      %p63 = scmp.ne.s32.totalorder %s46, %s62
      %p64 = scmp.eq.s32.totalorder %s24, 0
      %p65 = por %p63, %p64
      %s66 = ssub.s32 %s25, %s37
      %p67 = scmp.eq.s32.totalorder %s66, 0
      %s69 = sadd.s32 %s68, 1
      %s70 = scalar_select %p67, %s68, %s69
      %p73 = pneg %p67
      %p74 = scmp.eq.s32.totalorder %s18, 1
      %p75 = por %p73, %p74
      %p76 = scmp.ne.s32.totalorder %s68, %s71
      %p77 = scmp.eq.s32.totalorder %s18, 0
      %p78 = por %p76, %p77
      %p79 = scmp.ne.s32.totalorder %s68, %s71
      %p80 = scmp.eq.s32.totalorder %s23, 1
      %p81 = por %p79, %p80
      %p82 = scmp.ne.s32.totalorder %s71, %s72
      %p83 = scmp.eq.s32.totalorder %s23, 0
      %p84 = por %p82, %p83
      %p85 = scmp.ne.s32.totalorder %s71, %s72
      %p86 = scmp.eq.s32.totalorder %s24, 1
      %p87 = por %p85, %p86
      %p89 = scmp.ne.s32.totalorder %s72, %s88
      %p90 = scmp.eq.s32.totalorder %s24, 0
      %p91 = por %p89, %p90
      %s92 = ssub.s32 %s25, %s37
      %p93 = scmp.eq.s32.totalorder %s92, 0
      %s95 = sadd.s32 %s94, 1
      %s96 = scalar_select %p93, %s94, %s95
      %p99 = pneg %p93
      %p100 = scmp.eq.s32.totalorder %s18, 1
      %p101 = por %p99, %p100
      %p102 = scmp.ne.s32.totalorder %s94, %s97
      %p103 = scmp.eq.s32.totalorder %s18, 0
      %p104 = por %p102, %p103
      %p105 = scmp.ne.s32.totalorder %s94, %s97
      %p106 = scmp.eq.s32.totalorder %s23, 1
      %p107 = por %p105, %p106
      %p108 = scmp.ne.s32.totalorder %s97, %s98
      %p109 = scmp.eq.s32.totalorder %s23, 0
      %p110 = por %p108, %p109
      %p111 = scmp.ne.s32.totalorder %s97, %s98
      %p112 = scmp.eq.s32.totalorder %s24, 1
      %p113 = por %p111, %p112
      %p115 = scmp.ne.s32.totalorder %s98, %s114
      %p116 = scmp.eq.s32.totalorder %s24, 0
      %p117 = por %p115, %p116
      %s118 = ssub.s32 %s26, %s33
      %s119 = ssub.s32 %s25, %s37
      %s120 = sor.u32 %s118, %s119
      %p121 = scmp.eq.s32.totalorder %s120, 0
      %s123 = sadd.s32 %s122, 1
      %s124 = scalar_select %p121, %s122, %s123
      %p127 = pneg %p121
      %p128 = scmp.eq.s32.totalorder %s18, 1
      %p129 = por %p127, %p128
      %p130 = scmp.ne.s32.totalorder %s122, %s125
      %p131 = scmp.eq.s32.totalorder %s18, 0
      %p132 = por %p130, %p131
      %p133 = scmp.ne.s32.totalorder %s122, %s125
      %p134 = scmp.eq.s32.totalorder %s23, 1
      %p135 = por %p133, %p134
      %p136 = scmp.ne.s32.totalorder %s125, %s126
      %p137 = scmp.eq.s32.totalorder %s23, 0
      %p138 = por %p136, %p137
      %p139 = scmp.ne.s32.totalorder %s125, %s126
      %p140 = scmp.eq.s32.totalorder %s24, 1
      %p141 = por %p139, %p140
      %p143 = scmp.ne.s32.totalorder %s126, %s142
      %p144 = scmp.eq.s32.totalorder %s24, 0
      %p145 = por %p143, %p144
      %p146 = scmp.le.s32.totalorder 1, %s18
      %p147 = scmp.lt.s32.totalorder %s18, 3
      %p148 = pnand %p146, %p147
      %p149 = pneg %p148
      // Predicated region
      $region9: #{tpu_custom_call.1} parent=5 // pred_check
        _
      $region10: #{tpu_custom_call.1} parent=5 // pred_check_branch
        %151 = sbr.rel (%p148) target = $region12
      $region11: #{tpu_custom_call.1} parent=5 // pred_region
        %s152 = ssub.s32 %s18, 1
      $region12: #{tpu_custom_call.1} parent=5 // pred_fallthru
        _
      %p153 = scmp.lt.s32.totalorder %s18, 2
      // Predicated region
      $region13: #{tpu_custom_call.1} parent=5 // pred_check
        %p154 = pneg %p153
      $region14: #{tpu_custom_call.1} parent=5 // pred_check_branch
        %156 = sbr.rel (%p154) target = $region16
      $region15: #{tpu_custom_call.1} parent=5 // pred_region
        // Predicated region
        $region17: #{tpu_custom_call.1} parent=15 // pred_check
          %p157 = pneg %p52
        $region18: #{tpu_custom_call.1} parent=15 // pred_check_branch
          %159 = sbr.rel (%p157) target = $region20
        $region19: #{tpu_custom_call.1} parent=15 // pred_region
          %s160 = sand.u32 %s42, 1
          %s161 = scalar_lea.sflag [#allocation3], %s160
          %s162 = sand.u32 %s42, 1
          %s163 = smul.addr %s162, 32
          %s164 = scalar_lea.vmem [#allocation2], %s163
          %166 = vsyncadd %s161, 0
          %s167 = smul.addr %s26, 2
          %s168 = sadd.s32 %s25, %s167
          %s169 = smul.addr %s168, 8
          %s170 = scalar_lea.hbm %s0, %s169
          %s171 = sshll.u32 %s170, 4
          %s172 = int_to_ptr.hbm [resolvable:$true] %s171
          %s173 = sshll.u32 %s164, 4
          %s174 = int_to_ptr.vmem [resolvable:$true] %s173
          %179 = dma.hbm_to_vmem [thread:$0]  %s172, 512, %s174, %s161, 256, 128, 8
        $region20: #{tpu_custom_call.1} parent=15 // pred_fallthru
          _
        // Predicated region
        $region21: #{tpu_custom_call.1} parent=15 // pred_check
          %p180 = pneg %p78
        $region22: #{tpu_custom_call.1} parent=15 // pred_check_branch
          %182 = sbr.rel (%p180) target = $region24
        $region23: #{tpu_custom_call.1} parent=15 // pred_region
          %s183 = sand.u32 %s18, 1
          %s184 = scalar_lea.sflag [#allocation6], %s183
          %s185 = sand.u32 %s68, 1
          %s186 = smul.addr %s185, 4
          %s187 = scalar_lea.vmem [#allocation5], %s186
          %189 = vsyncadd %s184, 0
          %s190 = smul.addr %s25, 4
          %s191 = scalar_lea.hbm %s1, %s190
          %s193 = sshll.u32 %s191, 4
          %s194 = int_to_ptr.hbm [resolvable:$true] %s193
          %s195 = sshll.u32 %s187, 4
          %s196 = int_to_ptr.vmem [resolvable:$true] %s195
          %198 = dma.hbm_to_vmem [thread:$0]  %s194, 64, %s196, %s184
        $region24: #{tpu_custom_call.1} parent=15 // pred_fallthru
          _
        // Predicated region
        $region25: #{tpu_custom_call.1} parent=15 // pred_check
          %p199 = pneg %p104
        $region26: #{tpu_custom_call.1} parent=15 // pred_check_branch
          %201 = sbr.rel (%p199) target = $region28
        $region27: #{tpu_custom_call.1} parent=15 // pred_region
          %s202 = sand.u32 %s18, 1
          %s203 = scalar_lea.sflag [#allocation6], %s202
          %s204 = sand.u32 %s94, 1
          %s205 = scalar_lea.vmem [#allocation7], %s204
          %207 = vsyncadd %s203, 0
          %s208 = scalar_lea.hbm %s2, %s25
          %s210 = sshll.u32 %s208, 4
          %s211 = int_to_ptr.hbm [resolvable:$true] %s210
          %s212 = sshll.u32 %s205, 4
          %s213 = int_to_ptr.vmem [resolvable:$true] %s212
          %215 = dma.hbm_to_vmem [thread:$0]  %s211, 16, %s213, %s203
        $region28: #{tpu_custom_call.1} parent=15 // pred_fallthru
          _
      $region16: #{tpu_custom_call.1} parent=5 // pred_fallthru
        _
      %p216 = scmp.le.s32.totalorder 1, %s18
      %p217 = scmp.lt.s32.totalorder %s18, 3
      %p218 = pnand %p216, %p217
      %p219 = pneg %p218
      // Predicated region
      $region29: #{tpu_custom_call.1} parent=5 // pred_check
        _
      $region30: #{tpu_custom_call.1} parent=5 // pred_check_branch
        %221 = sbr.rel (%p218) target = $region32
      $region31: #{tpu_custom_call.1} parent=5 // pred_region
        %s222 = ssub.s32 %s18, 1
        %s223 = sand.u32 %s45, 1
        %s224 = scalar_lea.sflag [#allocation3], %s223
        %s225 = sand.u32 %s45, 1
        %s226 = smul.addr %s225, 32
        %s227 = scalar_lea.vmem [#allocation2], %s226
        // Predicated region
        $region33: #{tpu_custom_call.1} parent=31 // pred_check
          %p228 = pneg %p58
        $region34: #{tpu_custom_call.1} parent=31 // pred_check_branch
          %230 = sbr.rel (%p228) target = $region36
        $region35: #{tpu_custom_call.1} parent=31 // pred_region
          %232 = dma.done %s224, 512
        $region36: #{tpu_custom_call.1} parent=31 // pred_fallthru
          _
        %s233 = sand.u32 %s23, 1
        %s234 = scalar_lea.sflag [#allocation6], %s233
        %s235 = sand.u32 %s71, 1
        %s236 = smul.addr %s235, 4
        %s237 = scalar_lea.vmem [#allocation5], %s236
        // Predicated region
        $region37: #{tpu_custom_call.1} parent=31 // pred_check
          %p238 = pneg %p84
        $region38: #{tpu_custom_call.1} parent=31 // pred_check_branch
          %240 = sbr.rel (%p238) target = $region40
        $region39: #{tpu_custom_call.1} parent=31 // pred_region
          %242 = dma.done %s234, 64
        $region40: #{tpu_custom_call.1} parent=31 // pred_fallthru
          _
        %s243 = sand.u32 %s23, 1
        %s244 = scalar_lea.sflag [#allocation6], %s243
        %s245 = sand.u32 %s97, 1
        %s246 = scalar_lea.vmem [#allocation7], %s245
        // Predicated region
        $region41: #{tpu_custom_call.1} parent=31 // pred_check
          %p247 = pneg %p110
        $region42: #{tpu_custom_call.1} parent=31 // pred_check_branch
          %249 = sbr.rel (%p247) target = $region44
        $region43: #{tpu_custom_call.1} parent=31 // pred_region
          %251 = dma.done %s244, 16
        $region44: #{tpu_custom_call.1} parent=31 // pred_fallthru
          _
        %s252 = sand.u32 %s45, 1
        %s253 = scalar_lea.sflag [#allocation3], %s252
        %s254 = sand.u32 %s45, 1
        %s255 = smul.addr %s254, 32
        %s256 = scalar_lea.vmem [#allocation2], %s255
        %p257 = pneg %p58
        %p258 = pneg %p55
        %s259 = sand.u32 %s23, 1
        %s260 = scalar_lea.sflag [#allocation6], %s259
        %s261 = sand.u32 %s71, 1
        %s262 = smul.addr %s261, 4
        %s263 = scalar_lea.vmem [#allocation5], %s262
        %p264 = pneg %p84
        %p265 = pneg %p81
        %s266 = sand.u32 %s23, 1
        %s267 = scalar_lea.sflag [#allocation6], %s266
        %s268 = sand.u32 %s97, 1
        %s269 = scalar_lea.vmem [#allocation7], %s268
        %p270 = pneg %p110
        %p271 = pneg %p107
        %p272 = pneg %p138
        %p273 = pneg %p135
        %s274 = sand.u32 %s125, 1
        %s275 = scalar_lea.sflag [#allocation4], %s274
        %s276 = sand.u32 %s125, 1
        %s277 = smul.addr %s276, 8
        %s278 = scalar_lea.vmem [#allocation8], %s277
        %v279 = vld [vmem:[%s227] sm:$0xff]
        %v280 = vld [vmem:[%s237] sm:$0x1]
        %v281 = vperm.slane %v280, 0
        %v282 = vmul.f32 %v279, %v281
        %s283 = scalar_lea.vmem %s227, 8 [#allocation2]
        %v284 = vld [vmem:[%s283] sm:$0xff]
        %v285 = vld [vmem:[%s237 + $0x1] sm:$0x1]
        %v286 = vperm.slane %v285, 0
        %v287 = vmul.f32 %v284, %v286
        %v288 = vadd.f32 %v282, %v287
        %s289 = scalar_lea.vmem %s227, 16 [#allocation2]
        %v290 = vld [vmem:[%s289] sm:$0xff]
        %v291 = vld [vmem:[%s237 + $0x2] sm:$0x1]
        %v292 = vperm.slane %v291, 0
        %v293 = vmul.f32 %v290, %v292
        %v294 = vadd.f32 %v288, %v293
        %s295 = scalar_lea.vmem %s227, 24 [#allocation2]
        %v296 = vld [vmem:[%s295] sm:$0xff]
        %v297 = vld [vmem:[%s237 + $0x3] sm:$0x1]
        %v298 = vperm.slane %v297, 0
        %v299 = vmul.f32 %v296, %v298
        %v300 = vadd.f32 %v294, %v299
        %v301 = vld [vmem:[%s246] sm:$0x1]
        %v303 = vperm.slane %v301, 0
        %v305 = vadd.f32 %v300, %v303
        %v306 = vmax.f32 %v305, 0.0
        %307 = vst [vmem:[%s278] sm:$0xff] %v306
        %s308 = sand.u32 %s125, 1
        %s309 = scalar_lea.sflag [#allocation4], %s308
        %s310 = sand.u32 %s125, 1
        %s311 = smul.addr %s310, 8
        %s312 = scalar_lea.vmem [#allocation8], %s311
        // Predicated region
        $region45: #{tpu_custom_call.1} parent=31 // pred_check
          %p313 = pneg %p135
        $region46: #{tpu_custom_call.1} parent=31 // pred_check_branch
          %315 = sbr.rel (%p313) target = $region48
        $region47: #{tpu_custom_call.1} parent=31 // pred_region
          %317 = vsyncadd %s309, 0
          %s318 = smul.addr %s28, 2
          %s319 = sadd.s32 %s27, %s318
          %s320 = smul.addr %s319, 8
          %s321 = scalar_lea.hbm %s3, %s320
          %s323 = sshll.u32 %s312, 4
          %s324 = int_to_ptr.vmem [resolvable:$true] %s323
          %s325 = sshll.u32 %s321, 4
          %s326 = int_to_ptr.hbm [resolvable:$true] %s325
          %328 = dma.vmem_to_hbm [thread:$0]  %s324, 128, %s326, %s309
        $region48: #{tpu_custom_call.1} parent=31 // pred_fallthru
          _
      $region32: #{tpu_custom_call.1} parent=5 // pred_fallthru
        _
      %p329 = scmp.le.s32.totalorder 2, %s18
      // Predicated region
      $region49: #{tpu_custom_call.1} parent=5 // pred_check
        %p330 = pneg %p329
      $region50: #{tpu_custom_call.1} parent=5 // pred_check_branch
        %332 = sbr.rel (%p330) target = $region52
      $region51: #{tpu_custom_call.1} parent=5 // pred_region
        %s333 = ssub.s32 %s18, 2
        // Predicated region
        $region53: #{tpu_custom_call.1} parent=51 // pred_check
          %p334 = pneg %p141
        $region54: #{tpu_custom_call.1} parent=51 // pred_check_branch
          %336 = sbr.rel (%p334) target = $region56
        $region55: #{tpu_custom_call.1} parent=51 // pred_region
          %s337 = sand.u32 %s126, 1
          %s338 = scalar_lea.sflag [#allocation4], %s337
          %s339 = sand.u32 %s126, 1
          %s340 = smul.addr %s339, 8
          %s341 = scalar_lea.vmem [#allocation8], %s340
          %343 = dma.done %s338, 128
        $region56: #{tpu_custom_call.1} parent=51 // pred_fallthru
          _
      $region52: #{tpu_custom_call.1} parent=5 // pred_fallthru
        _
    $region6: #{tpu_custom_call.1} parent=1 // loop_footer
      %s22 = sadd.s32 1, %s18
    $region7: #{tpu_custom_call.1} parent=1 // loop_footer_branch
      %17 = sbr.rel target = $region3
    $region8: #{tpu_custom_call.1} parent=1 // loop_exit
      _
    %344 = vsyncpa [#allocation3], 1
    %s345 = scalar_lea.sflag [#allocation3], 1
    %346 = vsyncpa %s345, 1
    %347 = vsyncpa [#allocation6], 1
    %s348 = scalar_lea.sflag [#allocation6], 1
    %349 = vsyncpa %s348, 1
    %350 = vsyncpa [#allocation4], 1
    %s351 = scalar_lea.sflag [#allocation4], 1
    %352 = vsyncpa %s351, 1

</llo_original>
